<compile_context>
chip_gen: v7x
topology: tpu7x:2x2x1
jax: 0.10.0
libtpu: 0.0.40
codegen_flags: <defaults>
</compile_context>

<pallas_src>
import math

import jax
import jax.numpy as jnp
from jax.experimental import pallas as pl
from jax.experimental.pallas import tpu as pltpu


def _round_up(x, m):
    return (x + m - 1) // m * m


# ----------------------------------------------------------------------------
# Kernel 1: feature transform  XW = X @ W  (computed once, hoisted)
# ----------------------------------------------------------------------------
def _feat_transform_kernel(x_ref, w_ref, o_ref):
    o_ref[...] = jnp.dot(
        x_ref[...], w_ref[...], preferred_element_type=jnp.float32
    ).astype(o_ref.dtype)


def feat_transform(x_p, w_p, *, tile_m, vmem_limit_bytes):
    """(npad, F) bf16 @ (F, Hpad) bf16 -> (npad, Hpad) bf16, row-tiled."""
    npad, f = x_p.shape
    hpad = w_p.shape[1]
    return pl.pallas_call(
        _feat_transform_kernel,
        out_shape=jax.ShapeDtypeStruct((npad, hpad), jnp.bfloat16),
        grid_spec=pltpu.PrefetchScalarGridSpec(
            num_scalar_prefetch=0,
            grid=(npad // tile_m,),
            in_specs=[
                pl.BlockSpec((tile_m, f), lambda i: (i, 0)),   # X row tile
                pl.BlockSpec((f, hpad), lambda i: (0, 0)),     # W (resident)
            ],
            out_specs=pl.BlockSpec((tile_m, hpad), lambda i: (i, 0)),
        ),
        compiler_params=pltpu.CompilerParams(
            dimension_semantics=("parallel",),
            vmem_limit_bytes=vmem_limit_bytes,
        ),
    )(x_p, w_p)


# ----------------------------------------------------------------------------
# Kernel 2: aggregation  out = A_norm @ XW + b  (accumulate directly in o_ref)
# ----------------------------------------------------------------------------
def _gcn_agg_kernel(a_ref, xw_ref, b_ref, o_ref):
    k = pl.program_id(1)

    @pl.when(k == 0)
    def _():
        o_ref[...] = jnp.zeros_like(o_ref)

    # (tile_m, tile_k) bf16 @ (tile_k, hpad) bf16 -> f32 accumulation in o_ref
    # (output block index is constant across k, so o_ref is resident).
    o_ref[...] += jnp.dot(a_ref[...], xw_ref[...], preferred_element_type=jnp.float32)

    @pl.when(k == pl.num_programs(1) - 1)
    def _():
        o_ref[...] = o_ref[...] + b_ref[...]


def gcn_aggregate(a_p, xw_p, b_p, *, tile_m, tile_k, vmem_limit_bytes):
    npad = a_p.shape[0]
    hpad = xw_p.shape[1]
    grid = (npad // tile_m, npad // tile_k)
    return pl.pallas_call(
        _gcn_agg_kernel,
        out_shape=jax.ShapeDtypeStruct((npad, hpad), jnp.float32),
        grid_spec=pltpu.PrefetchScalarGridSpec(
            num_scalar_prefetch=0,
            grid=grid,
            in_specs=[
                pl.BlockSpec((tile_m, tile_k), lambda i, k: (i, k)),  # A tile
                pl.BlockSpec((tile_k, hpad), lambda i, k: (k, 0)),    # XW k-tile
                pl.BlockSpec((1, hpad), lambda i, k: (0, 0)),         # bias
            ],
            out_specs=pl.BlockSpec((tile_m, hpad), lambda i, k: (i, 0)),
        ),
        compiler_params=pltpu.CompilerParams(
            dimension_semantics=("parallel", "arbitrary"),
            vmem_limit_bytes=vmem_limit_bytes,
        ),
    )(a_p, xw_p, b_p)


# ----------------------------------------------------------------------------
# Plain-JAX glue: padded bf16 normalized adjacency (PyG gcn_norm semantics)
# ----------------------------------------------------------------------------
def normalized_adjacency_bf16(edge_index, num_nodes, padded_nodes):
    """Builds D^-1/2 (A + I) D^-1/2 directly at padded size, casting to bf16 in
    the same scaling pass (no separate pad/astype O(N^2) passes). Matches
    torch_geometric gcn_norm: edges as given (no symmetrization), duplicate
    edges accumulate, add_remaining_self_loops, in-degree normalization."""
    src, dst = edge_index[0], edge_index[1]
    keep = (src != dst).astype(jnp.float32)  # pre-existing self loops -> weight 1
    a = jnp.zeros((padded_nodes, padded_nodes), jnp.float32).at[dst, src].add(keep)
    diag = jnp.arange(num_nodes)
    a = a.at[diag, diag].add(1.0)            # add_remaining_self_loops
    deg = jnp.sum(a, axis=1)                 # in-degree incl. self loop
    dinv = jnp.where(deg > 0, jax.lax.rsqrt(deg), 0.0)
    return (dinv[:, None] * a * dinv[None, :]).astype(jnp.bfloat16)


# ----------------------------------------------------------------------------
# Parameters & forward
# ----------------------------------------------------------------------------
def glorot_uniform(key, fan_in, fan_out):
    limit = math.sqrt(6.0 / (fan_in + fan_out))
    return jax.random.uniform(key, (fan_in, fan_out), jnp.float32, -limit, limit)


def init_gcn_body_params(key, nfeat, nhid):
    return {
        "w1": glorot_uniform(key, nfeat, nhid),
        "b1": jnp.zeros((nhid,), jnp.float32),
    }


def gcn_body_forward(params, x, edge_index, *, block=1024,
                     vmem_limit_bytes=32 * 1024 * 1024):
    """GCN_Body.forward: x = gc1(x, edge_index); return x."""
    n, f = x.shape
    w, b = params["w1"], params["b1"]
    h = w.shape[1]
    hpad = _round_up(max(h, 128), 128)       # lane-dense output width

    # Contraction tile: multiple of 16 sublanes (bf16), capped at `block`;
    # node count padded to a tile multiple (zero rows/cols are inert).
    tile_k = min(block, _round_up(n, 16))
    npad = _round_up(n, tile_k)
    n_k_tiles = npad // tile_k

    # Row tile: ensure >=2 tiles on the "parallel" axis when alignment allows,
    # so v7x's two TensorCores both get work even on single-k-tile graphs.
    if n_k_tiles >= 2:
        tile_m = tile_k
    elif npad % 32 == 0:
        tile_m = npad // 2
    else:
        tile_m = npad

    a_p = normalized_adjacency_bf16(edge_index, n, npad)
    x_p = jnp.pad(x, ((0, npad - n), (0, 0))).astype(jnp.bfloat16)
    w_p = jnp.pad(w, ((0, 0), (0, hpad - h))).astype(jnp.bfloat16)
    b_p = jnp.pad(b, (0, hpad - h)).reshape(1, hpad).astype(jnp.float32)

    # 1) XW computed once (hoisted); 2) aggregation streams A over it.
    xw_p = feat_transform(x_p, w_p, tile_m=tile_m, vmem_limit_bytes=vmem_limit_bytes)
    out = gcn_aggregate(a_p, xw_p, b_p, tile_m=tile_m, tile_k=tile_k,
                        vmem_limit_bytes=vmem_limit_bytes)
    return out[:n, :h]


# ----------------------------------------------------------------------------
if __name__ == "__main__":
    N, NFEAT, NHID, E = 16, 8, 16, 40

    key = jax.random.PRNGKey(0)
    k_x, k_e, k_p = jax.random.split(key, 3)

    x = jax.random.normal(k_x, (N, NFEAT), jnp.float32)
    edge_index = jax.random.randint(k_e, (2, E), 0, N, dtype=jnp.int32)
    params = init_gcn_body_params(k_p, NFEAT, NHID)

    out = jax.block_until_ready(gcn_body_forward(params, x, edge_index))
    assert out.shape == (N, NHID)

    # Pure-JAX f32 reference; kernel uses bf16 MXU operands -> loose tolerance.
    src, dst = edge_index[0], edge_index[1]
    keep = (src != dst).astype(jnp.float32)
    a_ref = jnp.zeros((N, N), jnp.float32).at[dst, src].add(keep) + jnp.eye(N)
    deg = a_ref.sum(axis=1)
    dinv = jnp.where(deg > 0, jax.lax.rsqrt(deg), 0.0)
    a_norm_ref = dinv[:, None] * a_ref * dinv[None, :]
    ref = a_norm_ref @ (x @ params["w1"]) + params["b1"]
    assert jnp.allclose(out, ref, rtol=5e-2, atol=5e-2), float(
        jnp.max(jnp.abs(out - ref))
    )

    print("KERNEL_OK")
</pallas_src>

<mosaic_0001>
module attributes {stable_mosaic.version = 11 : i64} {
  func.func @_feat_transform_kernel(%arg0: i32, %arg1: memref<16x8xbf16, #tpu.memory_space<vmem>>, %arg2: memref<8x128xbf16, #tpu.memory_space<vmem>>, %arg3: memref<16x128xbf16, #tpu.memory_space<vmem>>) attributes {dimension_semantics = [#tpu.dimension_semantics<parallel>], iteration_bounds = array<i64: 1>, scalar_prefetch = 0 : i64, scratch_operands = 0 : i64, tpu.core_type = #tpu.core_type<tc>, window_params = [{transform_indices = @transform_0, window_bounds = array<i64: 16, 8>}, {pipeline_mode = #tpu.pipeline_mode<synchronous>, transform_indices = @transform_1, window_bounds = array<i64: 8, 128>}, {transform_indices = @transform_2, window_bounds = array<i64: 16, 128>}]} {
    %c0 = arith.constant 0 : index
    %c0_0 = arith.constant 0 : index
    %0 = vector.load %arg1[%c0, %c0_0] : memref<16x8xbf16, #tpu.memory_space<vmem>>, vector<16x8xbf16>
    %c0_1 = arith.constant 0 : index
    %c0_2 = arith.constant 0 : index
    %1 = vector.load %arg2[%c0_1, %c0_2] : memref<8x128xbf16, #tpu.memory_space<vmem>>, vector<8x128xbf16>
    %cst = arith.constant dense<0.000000e+00> : vector<16x128xf32>
    %2 = tpu.matmul %0, %1, %cst {dimension_numbers = #tpu.dot_dimension_numbers<[1], [0], [0], [1], [0, 0, 1, 1], [], []>} : vector<16x8xbf16>, vector<8x128xbf16>, vector<16x128xf32> -> vector<16x128xf32>
    %3 = arith.truncf %2 : vector<16x128xf32> to vector<16x128xbf16>
    %c0_3 = arith.constant 0 : index
    %c0_4 = arith.constant 0 : index
    %4 = vector.load %arg3[%c0_3, %c0_4] : memref<16x128xbf16, #tpu.memory_space<vmem>>, vector<16x128xbf16>
    tpu.vector_store %arg3[%c0_3, %c0_4], %3 {strides = array<i32>} : memref<16x128xbf16, #tpu.memory_space<vmem>>, vector<16x128xbf16>,
    return
  }
  func.func @transform_0(%arg0: i32) -> (i32, i32) {
    %c0_i32 = arith.constant 0 : i32
    %c0_i32_0 = arith.constant 0 : i32
    return %arg0, %c0_i32 : i32, i32
  }
  func.func @transform_1(%arg0: i32) -> (i32, i32) {
    %c0_i32 = arith.constant 0 : i32
    %c0_i32_0 = arith.constant 0 : i32
    %c0_i32_1 = arith.constant 0 : i32
    return %c0_i32, %c0_i32_0 : i32, i32
  }
  func.func @transform_2(%arg0: i32) -> (i32, i32) {
    %c0_i32 = arith.constant 0 : i32
    %c0_i32_0 = arith.constant 0 : i32
    return %arg0, %c0_i32 : i32, i32
  }
}

</mosaic_0001>

<llo_original>
// kernel: tpu_custom_call.1
$region0: #{tpu_custom_call.1}
  #allocation0 [shape = 'u32[]', space=smem, size = 0x4, offset = 0x4, fixed_abs, tag = 'smem constant byte address 0x4 - core index']
  #allocation1 [shape = 'u32[144,128]{1,0:T(1,128)}', space=vmem, size = 0x12000, scoped, tag = 'internal scratch']
  %s0 = inlined_call_operand.vmem [shape: bf16[16,8], index: 0, kind: input, shape index: {}]
  %s1 = inlined_call_operand.vmem [shape: bf16[8,128], index: 1, kind: input, shape index: {}]
  %s2 = inlined_call_operand.hbm [shape: bf16[16,128], index: 2, kind: output, shape index: {}]
  %s3 = sld [smem:[#allocation0]]
  $region18: #{tpu_custom_call.1} parent=0
    _
  %s5 = ssub.s32 1, %s3
  %s6 = scalar_select 0, %s5, %s3
  $region1: #{tpu_custom_call.1} parent=0
    #allocation2 [shape = 'u8[4096]{0}', space=vmem, size = 0x1000, scoped, tag = 'output window, operand 0, single buffered']
    #allocation3 [shape = 's32[1]{0}', space=sflag, size = 0x4, scoped, tag = 'scoped memory for tpu_custom_call.1']
    %7 = vsyncpa [#allocation3], 0
    // Predicated region
    $region2: #{tpu_custom_call.1} parent=1 // pred_check
      _
    $region3: #{tpu_custom_call.1} parent=1 // pred_check_branch
      %9 = sbr.rel (0) target = $region5
    $region4: #{tpu_custom_call.1} parent=1 // pred_region
      _
    $region5: #{tpu_custom_call.1} parent=1 // pred_fallthru
      _
    // Predicated region
    $region6: #{tpu_custom_call.1} parent=1 // pred_check
      _
    $region7: #{tpu_custom_call.1} parent=1 // pred_check_branch
      %11 = sbr.rel (0) target = $region9
    $region8: #{tpu_custom_call.1} parent=1 // pred_region
      _
    $region9: #{tpu_custom_call.1} parent=1 // pred_fallthru
      _
    %v13 = vld [vmem:[%s0] sm:$0xf]
    %v14 = vld [vmem:[%s0 + $0x4] sm:$0xf]
    %v15 = vld [vmem:[%s1] sm:$0xf]
    %v18 = vunpack.c.l.b16 %v13
    %v19 = vunpack.c.l.b16 %v14
    %v20 = vpack.c.b16 %v19, %v18
    %vm21 = vcmask 64512
    %v23 = vsel %vm21, %v20, 0
    %vm25 = vcmask 1043456
    %v27 = vsel %vm25, %v15, 0
    %29 = vmatprep.subr.bf16.mxu0 0
    %30 = vmatpush1.bf16.msra.mxu0 %v27
    %31 = vmatprep.subr.bf16.mxu0 0
    %32 = vmatpush1.bf16.msra.mxu0 0
    %33 = vmatprep.subr.bf16.mxu0 0
    %34 = vmatpush1.bf16.msra.mxu0 0
    %35 = vmatprep.subr.bf16.mxu0 0
    %36 = vmatpush1.bf16.msra.mxu0 0
    %37 = vmatprep.subr.bf16.mxu0 0
    %38 = vmatpush1.bf16.msra.mxu0 0
    %39 = vmatprep.subr.bf16.mxu0 0
    %40 = vmatpush1.bf16.msra.mxu0 0
    %41 = vmatprep.subr.bf16.mxu0 0
    %42 = vmatpush1.bf16.msra.mxu0 0
    %43 = vmatprep.subr.bf16.mxu0 0
    %44 = vmatpush1.bf16.msra.mxu0 0
    %45 = vmatprep.subr.bf16.mxu0 0
    %46 = vmatpush1.bf16.msra.mxu0 0
    %47 = vmatprep.subr.bf16.mxu0 0
    %48 = vmatpush1.bf16.msra.mxu0 0
    %49 = vmatprep.subr.bf16.mxu0 0
    %50 = vmatpush1.bf16.msra.mxu0 0
    %51 = vmatprep.subr.bf16.mxu0 0
    %52 = vmatpush1.bf16.msra.mxu0 0
    %53 = vmatprep.subr.bf16.mxu0 0
    %54 = vmatpush1.bf16.msra.mxu0 0
    %55 = vmatprep.subr.bf16.mxu0 0
    %56 = vmatpush1.bf16.msra.mxu0 0
    %57 = vmatprep.subr.bf16.mxu0 0
    %58 = vmatpush1.bf16.msra.mxu0 0
    %59 = vmatprep.subr.bf16.mxu0 0
    %60 = vmatpush1.bf16.msra.mxu0 0
    %61 = vmatprep.mubr.bf16.mxu0 0
    %62 = vmatmul.mubr.bf16.gmra.mrb[0].mxu0 %v23
    %v63 = vpop.f32.mrb[0].mxu0
    %v64 = vadd.f32 0.0, %v63
    %v65 = vpop.f32.mrb[0].mxu0
    %v66 = vpop.f32.mrb[0].mxu0
    %v67 = vadd.f32 0.0, %v66
    %v68 = vpop.f32.mrb[0].mxu0
    %69 = vdwg.mxu0
    %v70 = vpack.c.bf16 %v67, %v64
    %v72 = vunpack.c.l.b16 %v70
    %v73 = vunpack.c.h.b16 %v70
    %v74 = vpack.c.b16 %v72, %v72
    %v75 = vpack.c.b16 %v73, %v73
    %78 = vst [vmem:[#allocation2] sm:$0xf] %v74
    %79 = vst [vmem:[#allocation2 + $0x4] sm:$0xf] %v75
    // Predicated region
    $region10: #{tpu_custom_call.1} parent=1 // pred_check
      _
    $region11: #{tpu_custom_call.1} parent=1 // pred_check_branch
      %81 = sbr.rel (0) target = $region13
    $region12: #{tpu_custom_call.1} parent=1 // pred_region
      %s83 = ssub.s32 128, 128
      %84 = vsyncadd [#allocation3], %s83
      %s85 = sshll.u32 [#allocation2], 4
      %s86 = int_to_ptr.vmem [resolvable:$true] %s85
      %91 = dma.vmem_to_hbm [thread:$0]  %s86, 128, %s2, [#allocation3], 64, 64, 4
    $region13: #{tpu_custom_call.1} parent=1 // pred_fallthru
      _
    // Predicated region
    $region14: #{tpu_custom_call.1} parent=1 // pred_check
      _
    $region15: #{tpu_custom_call.1} parent=1 // pred_check_branch
      %93 = sbr.rel (0) target = $region17
    $region16: #{tpu_custom_call.1} parent=1 // pred_region
      %94 = dma.done [#allocation3], 128
    $region17: #{tpu_custom_call.1} parent=1 // pred_fallthru
      _
    %95 = vsyncpa [#allocation3], 1

</llo_original>
